<compile_context>
chip_gen: v7x
topology: tpu7x:2x2x1
jax: 0.10.0
libtpu: 0.0.40
codegen_flags: <defaults>
</compile_context>

<pallas_src>
import functools

import jax
import jax.numpy as jnp
from jax import lax
from jax.experimental import pallas as pl
from jax.experimental.pallas import tpu as pltpu


def _round_up(n, m):
    return ((n + m - 1) // m) * m


def word_encoder_kernel(x_ref,
                        w1_ref, b1_ref,
                        w2_ref, b2_ref,
                        w3_ref, b3_ref,
                        w4_ref, b4_ref,
                        o_ref):
    """One batch tile: Linear->ReLU->Linear->L2norm->Linear->ReLU->Linear->Tanh."""
    # Cast to the MXU dtype in-kernel (VPU cast hides under MXU work); all
    # accumulation / elementwise / normalize math stays f32.
    x = x_ref[...].astype(w1_ref.dtype)

    # ---- encoder ----
    h = jnp.dot(x, w1_ref[...], preferred_element_type=jnp.float32) + b1_ref[...]
    h = jnp.maximum(h, 0.0)                               # ReLU (VPU)
    z = jnp.dot(h.astype(w2_ref.dtype), w2_ref[...],
                preferred_element_type=jnp.float32) + b2_ref[...]

    # ---- F.normalize(p=2, dim=1): x / clamp_min(||x||_2, 1e-12)
    #      == x * rsqrt(clamp_min(sum(x^2), 1e-24))   (single EUP rsqrt) ----
    sumsq = jnp.sum(z * z, axis=1, keepdims=True)
    z = z * lax.rsqrt(jnp.maximum(sumsq, 1e-24))

    # ---- decoder ----
    d = jnp.dot(z.astype(w3_ref.dtype), w3_ref[...],
                preferred_element_type=jnp.float32) + b3_ref[...]
    d = jnp.maximum(d, 0.0)                               # ReLU
    o = jnp.dot(d.astype(w4_ref.dtype), w4_ref[...],
                preferred_element_type=jnp.float32) + b4_ref[...]
    o_ref[...] = jnp.tanh(o).astype(o_ref.dtype)          # Tanh (EUP)


def prepare_params(params, compute_dtype=jnp.bfloat16):
    """One-time packing of the 4 Linear layers.

    Casts weights to the MXU dtype and biases to f32 row vectors so the
    per-call forward carries no re-cast / re-layout passes.
    """
    w1, b1, w2, b2, w3, b3, w4, b4 = params
    cw = lambda w: jnp.asarray(w, compute_dtype)
    cb = lambda b: jnp.asarray(b, jnp.float32).reshape(1, -1)
    return (cw(w1), cb(b1), cw(w2), cb(b2), cw(w3), cb(b3), cw(w4), cb(b4))


def _vmem_capacity_bytes():
    # Trace-time hardware query.  The conservative fallback (v7x per-TC
    # capacity) only affects the size of a compiler *hint*, never semantics.
    try:
        return int(pltpu.get_tpu_info().vmem_capacity_bytes)
    except Exception:
        return 64 << 20


def _choose_block_b(B, block_b):
    bb = int(block_b)
    # v7x megacore: keep >= 2 grid steps (one per TensorCore) once the batch is
    # big enough that splitting does not push the tile into step-overhead
    # territory.
    if B > 256:
        bb = min(bb, _round_up(-(-B // 2), 256))
    bb = min(bb, _round_up(B, 8))
    return max(8, _round_up(bb, 8))


@functools.partial(jax.jit, static_argnames=("block_b", "out_dtype"))
def _word_encoder_impl(x, prepared, *, block_b, out_dtype):
    w1, b1, w2, b2, w3, b3, w4, b4 = prepared
    d_in, h0 = w1.shape
    h1 = w2.shape[1]

    x_flat = x.reshape(-1, d_in)          # metadata-only for contiguous x
    B = x_flat.shape[0]
    bb = _choose_block_b(B, block_b)
    grid = (pl.cdiv(B, bb),)

    w_itemsize = jnp.dtype(w1.dtype).itemsize
    x_itemsize = jnp.dtype(x.dtype).itemsize
    o_itemsize = jnp.dtype(out_dtype).itemsize
    w_elems = d_in * h0 + h0 * h1 + h1 * h0 + h0 * d_in

    # VMEM budget: double-buffered x/out tiles + double-buffered resident
    # weights/biases + f32 temps (and their bf16 copies), plus headroom for
    # Mosaic internal scratch.  Capped at 75% of the actual chip capacity.
    io_bytes = 2 * bb * d_in * (x_itemsize + o_itemsize)
    bias_vmem = 8 * 4 * (2 * _round_up(h0, 128) + _round_up(h1, 128)
                         + _round_up(d_in, 128))
    wb_bytes = 2 * (w_elems * w_itemsize + bias_vmem)
    tmp_bytes = bb * (2 * h0 + h1 + d_in) * (4 + w_itemsize)
    need = io_bytes + wb_bytes + tmp_bytes + (4 << 20)
    vmem_limit = int(max(32 << 20, min(need, (3 * _vmem_capacity_bytes()) // 4)))

    cost = pl.CostEstimate(
        flops=2 * B * w_elems,
        transcendentals=B * (d_in + 1),                   # tanh elems + rsqrt/row
        bytes_accessed=(B * d_in * (x_itemsize + o_itemsize)
                        + w_elems * w_itemsize
                        + (2 * h0 + h1 + d_in) * 4))

    const2d = lambda shape: pl.BlockSpec(shape, lambda i: (0, 0))

    return pl.pallas_call(
        word_encoder_kernel,
        out_shape=jax.ShapeDtypeStruct((B, d_in), out_dtype),
        grid_spec=pltpu.PrefetchScalarGridSpec(
            num_scalar_prefetch=0,
            grid=grid,
            in_specs=[
                pl.BlockSpec((bb, d_in), lambda i: (i, 0)),      # x tile
                const2d((d_in, h0)), const2d((1, h0)),           # W1, b1
                const2d((h0, h1)),   const2d((1, h1)),           # W2, b2
                const2d((h1, h0)),   const2d((1, h0)),           # W3, b3
                const2d((h0, d_in)), const2d((1, d_in)),         # W4, b4
            ],
            out_specs=pl.BlockSpec((bb, d_in), lambda i: (i, 0)),
        ),
        compiler_params=pltpu.CompilerParams(
            dimension_semantics=("parallel",),   # shards grid across v7x's 2 TCs
            vmem_limit_bytes=vmem_limit),
        cost_estimate=cost,
    )(x_flat, w1, b1, w2, b2, w3, b3, w4, b4)


def word_encoder_forward(x, prepared_params, *, block_b=1024, out_dtype=None):
    """WordEncoder.forward (encode=False).

    Args:
      x: (..., n_gram, embedding_size) or (B, n_gram*embedding_size) input.
      prepared_params: output of prepare_params() (bf16 weights, f32 biases).
      block_b: batch tile rows (sweep 512-2048; large batches are auto-clamped
        so the grid keeps >= 2 steps for v7x's two TensorCores).
      out_dtype: output storage dtype; defaults to x.dtype.  Pass jnp.bfloat16
        to halve the dominant HBM stream on mem-bound v6e/v7x.
    """
    out_dtype = jnp.dtype(out_dtype if out_dtype is not None else x.dtype)
    return _word_encoder_impl(x, prepared_params,
                              block_b=int(block_b), out_dtype=out_dtype)


def init_params(key, n_gram, embedding_size, n_features):
    """Deterministic init mimicking nn.Linear (uniform +/- 1/sqrt(fan_in))."""
    d_in = n_gram * embedding_size
    h0, h1 = n_features
    dims = [(d_in, h0), (h0, h1), (h1, h0), (h0, d_in)]
    params = []
    for (fin, fout) in dims:
        key, kw, kb = jax.random.split(key, 3)
        bound = 1.0 / jnp.sqrt(float(fin))
        w = jax.random.uniform(kw, (fin, fout), jnp.float32, -bound, bound)
        b = jax.random.uniform(kb, (fout,), jnp.float32, -bound, bound)
        params.extend([w, b])
    return tuple(params)


def reference_forward(x, params):
    """Pure-JAX f32 reference of WordEncoder.forward (encode=False)."""
    w1, b1, w2, b2, w3, b3, w4, b4 = params
    d_in = w1.shape[0]
    out = x.reshape(-1, d_in)
    out = jnp.maximum(out @ w1 + b1, 0.0)
    out = out @ w2 + b2
    norm = jnp.sqrt(jnp.sum(out * out, axis=1, keepdims=True))
    out = out / jnp.maximum(norm, 1e-12)
    out = jnp.maximum(out @ w3 + b3, 0.0)
    out = jnp.tanh(out @ w4 + b4)
    return out


if __name__ == "__main__":
    # Small stand-in shapes (production: n_gram=3, embedding=300, features=(600,300)).
    # These exercise non-lane-aligned feature dims (300/200/100) and a
    # non-divisible batch grid (40 rows with a 16-row tile -> 3 steps).
    n_gram = 3
    embedding_size = 100
    n_features = (200, 100)
    batch = 40

    key = jax.random.PRNGKey(0)
    kx, kp = jax.random.split(key)
    x = jax.random.normal(kx, (batch, n_gram, embedding_size), jnp.float32)
    params = init_params(kp, n_gram, embedding_size, n_features)
    prepared = prepare_params(params)            # one-time bf16 pack of weights

    # block_b=16 only to exercise a multi-step, non-divisible grid on this tiny
    # demo; production default is block_b=1024.
    out = word_encoder_forward(x, prepared, block_b=16)
    out = jax.block_until_ready(out)

    ref = reference_forward(x, params)
    assert out.shape == (batch, n_gram * embedding_size)
    # bf16 matmul operands (f32 accumulate) -> deliberately loosened tolerance
    # vs the f32 reference; the normalize / padding-free math itself is exact.
    err = float(jnp.max(jnp.abs(out - ref)))
    assert jnp.allclose(out, ref, atol=2e-2, rtol=2e-2), (
        f"mismatch vs reference: max abs err {err:.3e}")
    print("KERNEL_OK")
</pallas_src>

<mosaic_0001>
module attributes {stable_mosaic.version = 11 : i64} {
  func.func @word_encoder_kernel(%arg0: i32, %arg1: memref<16x300xf32, #tpu.memory_space<vmem>>, %arg2: memref<300x200xbf16, #tpu.memory_space<vmem>>, %arg3: memref<1x200xf32, #tpu.memory_space<vmem>>, %arg4: memref<200x100xbf16, #tpu.memory_space<vmem>>, %arg5: memref<1x100xf32, #tpu.memory_space<vmem>>, %arg6: memref<100x200xbf16, #tpu.memory_space<vmem>>, %arg7: memref<1x200xf32, #tpu.memory_space<vmem>>, %arg8: memref<200x300xbf16, #tpu.memory_space<vmem>>, %arg9: memref<1x300xf32, #tpu.memory_space<vmem>>, %arg10: memref<16x300xf32, #tpu.memory_space<vmem>>) attributes {dimension_semantics = [#tpu.dimension_semantics<parallel>], iteration_bounds = array<i64: 3>, scalar_prefetch = 0 : i64, scratch_operands = 0 : i64, tpu.core_type = #tpu.core_type<tc>, window_params = [{transform_indices = @transform_0, window_bounds = array<i64: 16, 300>}, {pipeline_mode = #tpu.pipeline_mode<synchronous>, transform_indices = @transform_1, window_bounds = array<i64: 300, 200>}, {pipeline_mode = #tpu.pipeline_mode<synchronous>, transform_indices = @transform_2, window_bounds = array<i64: 1, 200>}, {pipeline_mode = #tpu.pipeline_mode<synchronous>, transform_indices = @transform_3, window_bounds = array<i64: 200, 100>}, {pipeline_mode = #tpu.pipeline_mode<synchronous>, transform_indices = @transform_4, window_bounds = array<i64: 1, 100>}, {pipeline_mode = #tpu.pipeline_mode<synchronous>, transform_indices = @transform_5, window_bounds = array<i64: 100, 200>}, {pipeline_mode = #tpu.pipeline_mode<synchronous>, transform_indices = @transform_6, window_bounds = array<i64: 1, 200>}, {pipeline_mode = #tpu.pipeline_mode<synchronous>, transform_indices = @transform_7, window_bounds = array<i64: 200, 300>}, {pipeline_mode = #tpu.pipeline_mode<synchronous>, transform_indices = @transform_8, window_bounds = array<i64: 1, 300>}, {transform_indices = @transform_9, window_bounds = array<i64: 16, 300>}]} {
    %c0 = arith.constant 0 : index
    %c0_0 = arith.constant 0 : index
    %0 = vector.load %arg1[%c0, %c0_0] : memref<16x300xf32, #tpu.memory_space<vmem>>, vector<16x300xf32>
    %1 = arith.truncf %0 : vector<16x300xf32> to vector<16x300xbf16>
    %c0_1 = arith.constant 0 : index
    %c0_2 = arith.constant 0 : index
    %2 = vector.load %arg2[%c0_1, %c0_2] : memref<300x200xbf16, #tpu.memory_space<vmem>>, vector<300x200xbf16>
    %cst = arith.constant dense<0.000000e+00> : vector<16x200xf32>
    %3 = tpu.matmul %1, %2, %cst {dimension_numbers = #tpu.dot_dimension_numbers<[1], [0], [0], [1], [0, 0, 1, 1], [], []>} : vector<16x300xbf16>, vector<300x200xbf16>, vector<16x200xf32> -> vector<16x200xf32>
    %c0_3 = arith.constant 0 : index
    %c0_4 = arith.constant 0 : index
    %4 = vector.load %arg3[%c0_3, %c0_4] : memref<1x200xf32, #tpu.memory_space<vmem>>, vector<1x200xf32>
    %5 = vector.broadcast %4 : vector<1x200xf32> to vector<16x200xf32>
    %6 = arith.addf %3, %5 : vector<16x200xf32>
    %cst_5 = arith.constant 0.000000e+00 : f32
    %7 = vector.broadcast %cst_5 : f32 to vector<16x200xf32>
    %8 = arith.maximumf %6, %7 : vector<16x200xf32>
    %9 = arith.truncf %8 : vector<16x200xf32> to vector<16x200xbf16>
    %c0_6 = arith.constant 0 : index
    %c0_7 = arith.constant 0 : index
    %10 = vector.load %arg4[%c0_6, %c0_7] : memref<200x100xbf16, #tpu.memory_space<vmem>>, vector<200x100xbf16>
    %cst_8 = arith.constant dense<0.000000e+00> : vector<16x100xf32>
    %11 = tpu.matmul %9, %10, %cst_8 {dimension_numbers = #tpu.dot_dimension_numbers<[1], [0], [0], [1], [0, 0, 1, 1], [], []>} : vector<16x200xbf16>, vector<200x100xbf16>, vector<16x100xf32> -> vector<16x100xf32>
    %c0_9 = arith.constant 0 : index
    %c0_10 = arith.constant 0 : index
    %12 = vector.load %arg5[%c0_9, %c0_10] : memref<1x100xf32, #tpu.memory_space<vmem>>, vector<1x100xf32>
    %13 = vector.broadcast %12 : vector<1x100xf32> to vector<16x100xf32>
    %14 = arith.addf %11, %13 : vector<16x100xf32>
    %15 = arith.mulf %14, %14 : vector<16x100xf32>
    %cst_11 = arith.constant dense<0.000000e+00> : vector<16xf32>
    %16 = vector.multi_reduction <add>, %15, %cst_11 [1] : vector<16x100xf32> to vector<16xf32>
    %17 = vector.shape_cast %16 : vector<16xf32> to vector<16x1xf32>
    %cst_12 = arith.constant 1.000000e-24 : f32
    %18 = vector.broadcast %cst_12 : f32 to vector<16x1xf32>
    %19 = arith.maximumf %17, %18 : vector<16x1xf32>
    %20 = math.rsqrt %19 : vector<16x1xf32>
    %21 = vector.broadcast %20 : vector<16x1xf32> to vector<16x100xf32>
    %22 = arith.mulf %14, %21 : vector<16x100xf32>
    %23 = arith.truncf %22 : vector<16x100xf32> to vector<16x100xbf16>
    %c0_13 = arith.constant 0 : index
    %c0_14 = arith.constant 0 : index
    %24 = vector.load %arg6[%c0_13, %c0_14] : memref<100x200xbf16, #tpu.memory_space<vmem>>, vector<100x200xbf16>
    %cst_15 = arith.constant dense<0.000000e+00> : vector<16x200xf32>
    %25 = tpu.matmul %23, %24, %cst_15 {dimension_numbers = #tpu.dot_dimension_numbers<[1], [0], [0], [1], [0, 0, 1, 1], [], []>} : vector<16x100xbf16>, vector<100x200xbf16>, vector<16x200xf32> -> vector<16x200xf32>
    %c0_16 = arith.constant 0 : index
    %c0_17 = arith.constant 0 : index
    %26 = vector.load %arg7[%c0_16, %c0_17] : memref<1x200xf32, #tpu.memory_space<vmem>>, vector<1x200xf32>
    %27 = vector.broadcast %26 : vector<1x200xf32> to vector<16x200xf32>
    %28 = arith.addf %25, %27 : vector<16x200xf32>
    %cst_18 = arith.constant 0.000000e+00 : f32
    %29 = vector.broadcast %cst_18 : f32 to vector<16x200xf32>
    %30 = arith.maximumf %28, %29 : vector<16x200xf32>
    %31 = arith.truncf %30 : vector<16x200xf32> to vector<16x200xbf16>
    %c0_19 = arith.constant 0 : index
    %c0_20 = arith.constant 0 : index
    %32 = vector.load %arg8[%c0_19, %c0_20] : memref<200x300xbf16, #tpu.memory_space<vmem>>, vector<200x300xbf16>
    %cst_21 = arith.constant dense<0.000000e+00> : vector<16x300xf32>
    %33 = tpu.matmul %31, %32, %cst_21 {dimension_numbers = #tpu.dot_dimension_numbers<[1], [0], [0], [1], [0, 0, 1, 1], [], []>} : vector<16x200xbf16>, vector<200x300xbf16>, vector<16x300xf32> -> vector<16x300xf32>
    %c0_22 = arith.constant 0 : index
    %c0_23 = arith.constant 0 : index
    %34 = vector.load %arg9[%c0_22, %c0_23] : memref<1x300xf32, #tpu.memory_space<vmem>>, vector<1x300xf32>
    %35 = vector.broadcast %34 : vector<1x300xf32> to vector<16x300xf32>
    %36 = arith.addf %33, %35 : vector<16x300xf32>
    %37 = math.tanh %36 : vector<16x300xf32>
    %c0_24 = arith.constant 0 : index
    %c0_25 = arith.constant 0 : index
    %38 = vector.load %arg10[%c0_24, %c0_25] : memref<16x300xf32, #tpu.memory_space<vmem>>, vector<16x300xf32>
    tpu.vector_store %arg10[%c0_24, %c0_25], %37 {strides = array<i32>} : memref<16x300xf32, #tpu.memory_space<vmem>>, vector<16x300xf32>,
    return
  }
  func.func @transform_0(%arg0: i32) -> (i32, i32) {
    %c0_i32 = arith.constant 0 : i32
    %c0_i32_0 = arith.constant 0 : i32
    return %arg0, %c0_i32 : i32, i32
  }
  func.func @transform_1(%arg0: i32) -> (i32, i32) {
    %c0_i32 = arith.constant 0 : i32
    %c0_i32_0 = arith.constant 0 : i32
    %c0_i32_1 = arith.constant 0 : i32
    return %c0_i32, %c0_i32_0 : i32, i32
  }
  func.func @transform_2(%arg0: i32) -> (i32, i32) {
    %c0_i32 = arith.constant 0 : i32
    %c0_i32_0 = arith.constant 0 : i32
    %c0_i32_1 = arith.constant 0 : i32
    return %c0_i32, %c0_i32_0 : i32, i32
  }
  func.func @transform_3(%arg0: i32) -> (i32, i32) {
    %c0_i32 = arith.constant 0 : i32
    %c0_i32_0 = arith.constant 0 : i32
    %c0_i32_1 = arith.constant 0 : i32
    return %c0_i32, %c0_i32_0 : i32, i32
  }
  func.func @transform_4(%arg0: i32) -> (i32, i32) {
    %c0_i32 = arith.constant 0 : i32
    %c0_i32_0 = arith.constant 0 : i32
    %c0_i32_1 = arith.constant 0 : i32
    return %c0_i32, %c0_i32_0 : i32, i32
  }
  func.func @transform_5(%arg0: i32) -> (i32, i32) {
    %c0_i32 = arith.constant 0 : i32
    %c0_i32_0 = arith.constant 0 : i32
    %c0_i32_1 = arith.constant 0 : i32
    return %c0_i32, %c0_i32_0 : i32, i32
  }
  func.func @transform_6(%arg0: i32) -> (i32, i32) {
    %c0_i32 = arith.constant 0 : i32
    %c0_i32_0 = arith.constant 0 : i32
    %c0_i32_1 = arith.constant 0 : i32
    return %c0_i32, %c0_i32_0 : i32, i32
  }
  func.func @transform_7(%arg0: i32) -> (i32, i32) {
    %c0_i32 = arith.constant 0 : i32
    %c0_i32_0 = arith.constant 0 : i32
    %c0_i32_1 = arith.constant 0 : i32
    return %c0_i32, %c0_i32_0 : i32, i32
  }
  func.func @transform_8(%arg0: i32) -> (i32, i32) {
    %c0_i32 = arith.constant 0 : i32
    %c0_i32_0 = arith.constant 0 : i32
    %c0_i32_1 = arith.constant 0 : i32
    return %c0_i32, %c0_i32_0 : i32, i32
  }
  func.func @transform_9(%arg0: i32) -> (i32, i32) {
    %c0_i32 = arith.constant 0 : i32
    %c0_i32_0 = arith.constant 0 : i32
    return %arg0, %c0_i32 : i32, i32
  }
}

</mosaic_0001>

<llo_original>
// kernel: _word_encoder_impl.1
$region0: #{_word_encoder_impl.1}
  #allocation0 [shape = 'u32[]', space=smem, size = 0x4, offset = 0x4, fixed_abs, tag = 'smem constant byte address 0x4 - core index']
  #allocation1 [shape = 'u32[144,128]{1,0:T(1,128)}', space=vmem, size = 0x12000, scoped, tag = 'internal scratch']
  %s0 = inlined_call_operand.vmem [shape: f32[40,300], index: 0, kind: input, shape index: {}]
  %s1 = inlined_call_operand.vmem [shape: bf16[300,200], index: 1, kind: input, shape index: {}]
  %s2 = inlined_call_operand.vmem [shape: f32[1,200], index: 2, kind: input, shape index: {}]
  %s3 = inlined_call_operand.vmem [shape: bf16[200,100], index: 3, kind: input, shape index: {}]
  %s4 = inlined_call_operand.vmem [shape: f32[1,100], index: 4, kind: input, shape index: {}]
  %s5 = inlined_call_operand.vmem [shape: bf16[100,200], index: 5, kind: input, shape index: {}]
  %s6 = inlined_call_operand.vmem [shape: f32[1,200], index: 6, kind: input, shape index: {}]
  %s7 = inlined_call_operand.vmem [shape: bf16[200,300], index: 7, kind: input, shape index: {}]
  %s8 = inlined_call_operand.vmem [shape: f32[1,300], index: 8, kind: input, shape index: {}]
  %s9 = inlined_call_operand.hbm [shape: f32[40,300], index: 9, kind: output, shape index: {}]
  %s10 = sld [smem:[#allocation0]]
  $region69: #{_word_encoder_impl.1} parent=0
    _
  %s12 = ssub.s32 1, %s10
  %s13 = scalar_select 0, %s12, %s10
  $region1: #{_word_encoder_impl.1} parent=0
    #allocation2 [shape = 'u8[49152]{0}', space=vmem, size = 0xc000, scoped, tag = 'output window, operand 0']
    #allocation3 [shape = 's32[2]{0}', space=sflag, size = 0x8, scoped, tag = 'scoped memory for _word_encoder_impl.1']
    %14 = vsyncpa [#allocation3], 0
    %s15 = scalar_lea.sflag [#allocation3], 1
    %16 = vsyncpa %s15, 0
    loop: start=0, step=1, limit=5
    $region2: #{_word_encoder_impl.1} parent=1 // loop_pre_header
      _
    $region3: #{_word_encoder_impl.1} parent=1 // loop_header
      %s18 = sphi 0, %s22
      %p19 = scmp.ge.s32.totalorder %s18, 5
      %s28 = sphi 0, %s30
      %s31 = sphi 0, %s28
      %s32 = sphi 0, %s31
      %s48 = sphi 0, %s32
      %s52 = sphi 0, %s52
      %s54 = sphi 0, %s52
      %s55 = sphi 0, %s54
      %s69 = sphi 0, %s55
      %s73 = sphi 0, %s73
      %s75 = sphi 0, %s73
      %s76 = sphi 0, %s75
      %s90 = sphi 0, %s76
      %s94 = sphi 0, %s94
      %s96 = sphi 0, %s94
      %s97 = sphi 0, %s96
      %s111 = sphi 0, %s97
      %s115 = sphi 0, %s115
      %s117 = sphi 0, %s115
      %s118 = sphi 0, %s117
      %s132 = sphi 0, %s118
      %s136 = sphi 0, %s136
      %s138 = sphi 0, %s136
      %s139 = sphi 0, %s138
      %s153 = sphi 0, %s139
      %s157 = sphi 0, %s157
      %s159 = sphi 0, %s157
      %s160 = sphi 0, %s159
      %s174 = sphi 0, %s160
      %s178 = sphi 0, %s178
      %s180 = sphi 0, %s178
      %s181 = sphi 0, %s180
      %s195 = sphi 0, %s181
      %s199 = sphi 0, %s199
      %s201 = sphi 0, %s199
      %s202 = sphi 0, %s201
      %s216 = sphi 0, %s202
      %s222 = sphi 0, %s224
      %s225 = sphi 0, %s222
      %s226 = sphi 0, %s225
      %s242 = sphi 0, %s226
    $region4: #{_word_encoder_impl.1} parent=1 // loop_header_branch
      %21 = sbr.rel (%p19) target = $region8
    $region5: #{_word_encoder_impl.1} parent=1 // loop_body
      %s23 = ssub.s32 %s18, 1
      %s24 = ssub.s32 %s18, 2
      %s25 = sadd.s32 %s18, 1
      %s26 = ssub.s32 %s18, %s25
      %p27 = scmp.eq.s32.totalorder %s26, 0
      %s29 = sadd.s32 %s28, 1
      %s30 = scalar_select %p27, %s28, %s29
      %p33 = pneg %p27
      %p34 = scmp.eq.s32.totalorder %s18, 2
      %p35 = por %p33, %p34
      %p36 = scmp.ne.s32.totalorder %s28, %s31
      %p37 = scmp.eq.s32.totalorder %s18, 0
      %p38 = por %p36, %p37
      %p39 = scmp.ne.s32.totalorder %s28, %s31
      %p40 = scmp.eq.s32.totalorder %s23, 2
      %p41 = por %p39, %p40
      %p42 = scmp.ne.s32.totalorder %s31, %s32
      %p43 = scmp.eq.s32.totalorder %s23, 0
      %p44 = por %p42, %p43
      %p45 = scmp.ne.s32.totalorder %s31, %s32
      %p46 = scmp.eq.s32.totalorder %s24, 2
      %p47 = por %p45, %p46
      %p49 = scmp.ne.s32.totalorder %s32, %s48
      %p50 = scmp.eq.s32.totalorder %s24, 0
      %p51 = por %p49, %p50
      %s53 = sadd.s32 %s52, 1
      %p56 = scmp.eq.s32.totalorder %s18, 2
      %p57 = scmp.ne.s32.totalorder %s52, %s54
      %p58 = scmp.eq.s32.totalorder %s18, 0
      %p59 = por %p57, %p58
      %p60 = scmp.ne.s32.totalorder %s52, %s54
      %p61 = scmp.eq.s32.totalorder %s23, 2
      %p62 = por %p60, %p61
      %p63 = scmp.ne.s32.totalorder %s54, %s55
      %p64 = scmp.eq.s32.totalorder %s23, 0
      %p65 = por %p63, %p64
      %p66 = scmp.ne.s32.totalorder %s54, %s55
      %p67 = scmp.eq.s32.totalorder %s24, 2
      %p68 = por %p66, %p67
      %p70 = scmp.ne.s32.totalorder %s55, %s69
      %p71 = scmp.eq.s32.totalorder %s24, 0
      %p72 = por %p70, %p71
      %s74 = sadd.s32 %s73, 1
      %p77 = scmp.eq.s32.totalorder %s18, 2
      %p78 = scmp.ne.s32.totalorder %s73, %s75
      %p79 = scmp.eq.s32.totalorder %s18, 0
      %p80 = por %p78, %p79
      %p81 = scmp.ne.s32.totalorder %s73, %s75
      %p82 = scmp.eq.s32.totalorder %s23, 2
      %p83 = por %p81, %p82
      %p84 = scmp.ne.s32.totalorder %s75, %s76
      %p85 = scmp.eq.s32.totalorder %s23, 0
      %p86 = por %p84, %p85
      %p87 = scmp.ne.s32.totalorder %s75, %s76
      %p88 = scmp.eq.s32.totalorder %s24, 2
      %p89 = por %p87, %p88
      %p91 = scmp.ne.s32.totalorder %s76, %s90
      %p92 = scmp.eq.s32.totalorder %s24, 0
      %p93 = por %p91, %p92
      %s95 = sadd.s32 %s94, 1
      %p98 = scmp.eq.s32.totalorder %s18, 2
      %p99 = scmp.ne.s32.totalorder %s94, %s96
      %p100 = scmp.eq.s32.totalorder %s18, 0
      %p101 = por %p99, %p100
      %p102 = scmp.ne.s32.totalorder %s94, %s96
      %p103 = scmp.eq.s32.totalorder %s23, 2
      %p104 = por %p102, %p103
      %p105 = scmp.ne.s32.totalorder %s96, %s97
      %p106 = scmp.eq.s32.totalorder %s23, 0
      %p107 = por %p105, %p106
      %p108 = scmp.ne.s32.totalorder %s96, %s97
      %p109 = scmp.eq.s32.totalorder %s24, 2
      %p110 = por %p108, %p109
      %p112 = scmp.ne.s32.totalorder %s97, %s111
      %p113 = scmp.eq.s32.totalorder %s24, 0
      %p114 = por %p112, %p113
      %s116 = sadd.s32 %s115, 1
      %p119 = scmp.eq.s32.totalorder %s18, 2
      %p120 = scmp.ne.s32.totalorder %s115, %s117
      %p121 = scmp.eq.s32.totalorder %s18, 0
      %p122 = por %p120, %p121
      %p123 = scmp.ne.s32.totalorder %s115, %s117
      %p124 = scmp.eq.s32.totalorder %s23, 2
      %p125 = por %p123, %p124
      %p126 = scmp.ne.s32.totalorder %s117, %s118
      %p127 = scmp.eq.s32.totalorder %s23, 0
      %p128 = por %p126, %p127
      %p129 = scmp.ne.s32.totalorder %s117, %s118
      %p130 = scmp.eq.s32.totalorder %s24, 2
      %p131 = por %p129, %p130
      %p133 = scmp.ne.s32.totalorder %s118, %s132
      %p134 = scmp.eq.s32.totalorder %s24, 0
      %p135 = por %p133, %p134
      %s137 = sadd.s32 %s136, 1
      %p140 = scmp.eq.s32.totalorder %s18, 2
      %p141 = scmp.ne.s32.totalorder %s136, %s138
      %p142 = scmp.eq.s32.totalorder %s18, 0
      %p143 = por %p141, %p142
      %p144 = scmp.ne.s32.totalorder %s136, %s138
      %p145 = scmp.eq.s32.totalorder %s23, 2
      %p146 = por %p144, %p145
      %p147 = scmp.ne.s32.totalorder %s138, %s139
      %p148 = scmp.eq.s32.totalorder %s23, 0
      %p149 = por %p147, %p148
      %p150 = scmp.ne.s32.totalorder %s138, %s139
      %p151 = scmp.eq.s32.totalorder %s24, 2
      %p152 = por %p150, %p151
      %p154 = scmp.ne.s32.totalorder %s139, %s153
      %p155 = scmp.eq.s32.totalorder %s24, 0
      %p156 = por %p154, %p155
      %s158 = sadd.s32 %s157, 1
      %p161 = scmp.eq.s32.totalorder %s18, 2
      %p162 = scmp.ne.s32.totalorder %s157, %s159
      %p163 = scmp.eq.s32.totalorder %s18, 0
      %p164 = por %p162, %p163
      %p165 = scmp.ne.s32.totalorder %s157, %s159
      %p166 = scmp.eq.s32.totalorder %s23, 2
      %p167 = por %p165, %p166
      %p168 = scmp.ne.s32.totalorder %s159, %s160
      %p169 = scmp.eq.s32.totalorder %s23, 0
      %p170 = por %p168, %p169
      %p171 = scmp.ne.s32.totalorder %s159, %s160
      %p172 = scmp.eq.s32.totalorder %s24, 2
      %p173 = por %p171, %p172
      %p175 = scmp.ne.s32.totalorder %s160, %s174
      %p176 = scmp.eq.s32.totalorder %s24, 0
      %p177 = por %p175, %p176
      %s179 = sadd.s32 %s178, 1
      %p182 = scmp.eq.s32.totalorder %s18, 2
      %p183 = scmp.ne.s32.totalorder %s178, %s180
      %p184 = scmp.eq.s32.totalorder %s18, 0
      %p185 = por %p183, %p184
      %p186 = scmp.ne.s32.totalorder %s178, %s180
      %p187 = scmp.eq.s32.totalorder %s23, 2
      %p188 = por %p186, %p187
      %p189 = scmp.ne.s32.totalorder %s180, %s181
      %p190 = scmp.eq.s32.totalorder %s23, 0
      %p191 = por %p189, %p190
      %p192 = scmp.ne.s32.totalorder %s180, %s181
      %p193 = scmp.eq.s32.totalorder %s24, 2
      %p194 = por %p192, %p193
      %p196 = scmp.ne.s32.totalorder %s181, %s195
      %p197 = scmp.eq.s32.totalorder %s24, 0
      %p198 = por %p196, %p197
      %s200 = sadd.s32 %s199, 1
      %p203 = scmp.eq.s32.totalorder %s18, 2
      %p204 = scmp.ne.s32.totalorder %s199, %s201
      %p205 = scmp.eq.s32.totalorder %s18, 0
      %p206 = por %p204, %p205
      %p207 = scmp.ne.s32.totalorder %s199, %s201
      %p208 = scmp.eq.s32.totalorder %s23, 2
      %p209 = por %p207, %p208
      %p210 = scmp.ne.s32.totalorder %s201, %s202
      %p211 = scmp.eq.s32.totalorder %s23, 0
      %p212 = por %p210, %p211
      %p213 = scmp.ne.s32.totalorder %s201, %s202
      %p214 = scmp.eq.s32.totalorder %s24, 2
      %p215 = por %p213, %p214
      %p217 = scmp.ne.s32.totalorder %s202, %s216
      %p218 = scmp.eq.s32.totalorder %s24, 0
      %p219 = por %p217, %p218
      %s220 = ssub.s32 %s18, %s25
      %p221 = scmp.eq.s32.totalorder %s220, 0
      %s223 = sadd.s32 %s222, 1
      %s224 = scalar_select %p221, %s222, %s223
      %p227 = pneg %p221
      %p228 = scmp.eq.s32.totalorder %s18, 2
      %p229 = por %p227, %p228
      %p230 = scmp.ne.s32.totalorder %s222, %s225
      %p231 = scmp.eq.s32.totalorder %s18, 0
      %p232 = por %p230, %p231
      %p233 = scmp.ne.s32.totalorder %s222, %s225
      %p234 = scmp.eq.s32.totalorder %s23, 2
      %p235 = por %p233, %p234
      %p236 = scmp.ne.s32.totalorder %s225, %s226
      %p237 = scmp.eq.s32.totalorder %s23, 0
      %p238 = por %p236, %p237
      %p239 = scmp.ne.s32.totalorder %s225, %s226
      %p240 = scmp.eq.s32.totalorder %s24, 2
      %p241 = por %p239, %p240
      %p243 = scmp.ne.s32.totalorder %s226, %s242
      %p244 = scmp.eq.s32.totalorder %s24, 0
      %p245 = por %p243, %p244
      %p246 = scmp.le.s32.totalorder 1, %s18
      %p247 = scmp.lt.s32.totalorder %s18, 4
      %p248 = pnand %p246, %p247
      %p249 = pneg %p248
      // Predicated region
      $region9: #{_word_encoder_impl.1} parent=5 // pred_check
        _
      $region10: #{_word_encoder_impl.1} parent=5 // pred_check_branch
        %251 = sbr.rel (%p248) target = $region12
      $region11: #{_word_encoder_impl.1} parent=5 // pred_region
        %s252 = ssub.s32 %s18, 1
        // Predicated region
        $region13: #{_word_encoder_impl.1} parent=11 // pred_check
          %p253 = pneg %p65
        $region14: #{_word_encoder_impl.1} parent=11 // pred_check_branch
          %255 = sbr.rel (%p253) target = $region16
        $region15: #{_word_encoder_impl.1} parent=11 // pred_region
          _
        $region16: #{_word_encoder_impl.1} parent=11 // pred_fallthru
          _
        // Predicated region
        $region17: #{_word_encoder_impl.1} parent=11 // pred_check
          %p256 = pneg %p86
        $region18: #{_word_encoder_impl.1} parent=11 // pred_check_branch
          %258 = sbr.rel (%p256) target = $region20
        $region19: #{_word_encoder_impl.1} parent=11 // pred_region
          _
        $region20: #{_word_encoder_impl.1} parent=11 // pred_fallthru
          _
        // Predicated region
        $region21: #{_word_encoder_impl.1} parent=11 // pred_check
          %p259 = pneg %p107
        $region22: #{_word_encoder_impl.1} parent=11 // pred_check_branch
          %261 = sbr.rel (%p259) target = $region24
        $region23: #{_word_encoder_impl.1} parent=11 // pred_region
          _
        $region24: #{_word_encoder_impl.1} parent=11 // pred_fallthru
          _
        // Predicated region
        $region25: #{_word_encoder_impl.1} parent=11 // pred_check
          %p262 = pneg %p128
        $region26: #{_word_encoder_impl.1} parent=11 // pred_check_branch
          %264 = sbr.rel (%p262) target = $region28
        $region27: #{_word_encoder_impl.1} parent=11 // pred_region
          _
        $region28: #{_word_encoder_impl.1} parent=11 // pred_fallthru
          _
        // Predicated region
        $region29: #{_word_encoder_impl.1} parent=11 // pred_check
          %p265 = pneg %p149
        $region30: #{_word_encoder_impl.1} parent=11 // pred_check_branch
          %267 = sbr.rel (%p265) target = $region32
        $region31: #{_word_encoder_impl.1} parent=11 // pred_region
          _
        $region32: #{_word_encoder_impl.1} parent=11 // pred_fallthru
          _
        // Predicated region
        $region33: #{_word_encoder_impl.1} parent=11 // pred_check
          %p268 = pneg %p170
        $region34: #{_word_encoder_impl.1} parent=11 // pred_check_branch
          %270 = sbr.rel (%p268) target = $region36
        $region35: #{_word_encoder_impl.1} parent=11 // pred_region
          _
        $region36: #{_word_encoder_impl.1} parent=11 // pred_fallthru
          _
        // Predicated region
        $region37: #{_word_encoder_impl.1} parent=11 // pred_check
          %p271 = pneg %p191
        $region38: #{_word_encoder_impl.1} parent=11 // pred_check_branch
          %273 = sbr.rel (%p271) target = $region40
        $region39: #{_word_encoder_impl.1} parent=11 // pred_region
          _
        $region40: #{_word_encoder_impl.1} parent=11 // pred_fallthru
          _
        // Predicated region
        $region41: #{_word_encoder_impl.1} parent=11 // pred_check
          %p274 = pneg %p212
        $region42: #{_word_encoder_impl.1} parent=11 // pred_check_branch
          %276 = sbr.rel (%p274) target = $region44
        $region43: #{_word_encoder_impl.1} parent=11 // pred_region
          _
        $region44: #{_word_encoder_impl.1} parent=11 // pred_fallthru
          _
      $region12: #{_word_encoder_impl.1} parent=5 // pred_fallthru
        _
      %p277 = scmp.lt.s32.totalorder %s18, 3
      // Predicated region
      $region45: #{_word_encoder_impl.1} parent=5 // pred_check
        %p278 = pneg %p277
      $region46: #{_word_encoder_impl.1} parent=5 // pred_check_branch
        %280 = sbr.rel (%p278) target = $region48
      $region47: #{_word_encoder_impl.1} parent=5 // pred_region
        // Predicated region
        $region49: #{_word_encoder_impl.1} parent=47 // pred_check
          %p281 = pneg %p38
        $region50: #{_word_encoder_impl.1} parent=47 // pred_check_branch
          %283 = sbr.rel (%p281) target = $region52
        $region51: #{_word_encoder_impl.1} parent=47 // pred_region
          %s284 = smul.u32 2, %s18
          %s285 = ssub.s32 5, %s284
          %p286 = scmp.lt.s32.totalorder %s285, 2
          %s287 = scalar_select %p286, %s285, 2
          %s288 = smul.u32 128, %s287
          %s289 = smul.u32 %s288, 3
          %p290 = scmp.lt.s32.totalorder %s284, 4
          %s291 = scalar_select %p290, %s284, 4
          %s292 = smul.addr %s291, 3
          %s293 = smul.addr %s292, 8
          %s294 = scalar_lea.vmem %s0, %s293
          %s295 = smul.u32 2, %s18
          %s296 = ssub.s32 5, %s295
          %p297 = scmp.lt.s32.totalorder %s296, 2
          %s298 = scalar_select %p297, %s296, 2
          %s299 = smul.u32 128, %s298
          %s300 = smul.u32 %s299, 3
        $region52: #{_word_encoder_impl.1} parent=47 // pred_fallthru
          _
      $region48: #{_word_encoder_impl.1} parent=5 // pred_fallthru
        _
      %p301 = scmp.le.s32.totalorder 1, %s18
      %p302 = scmp.lt.s32.totalorder %s18, 4
      %p303 = pnand %p301, %p302
      %p304 = pneg %p303
      // Predicated region
      $region53: #{_word_encoder_impl.1} parent=5 // pred_check
        _
      $region54: #{_word_encoder_impl.1} parent=5 // pred_check_branch
        %306 = sbr.rel (%p303) target = $region56
      $region55: #{_word_encoder_impl.1} parent=5 // pred_region
        %s307 = ssub.s32 %s18, 1
        %s308 = smul.u32 2, %s23
        %s309 = ssub.s32 5, %s308
        %p310 = scmp.lt.s32.totalorder %s309, 2
        %s311 = scalar_select %p310, %s309, 2
        %s312 = smul.u32 128, %s311
        %s313 = smul.u32 %s312, 3
        %p314 = scmp.lt.s32.totalorder %s308, 4
        %s315 = scalar_select %p314, %s308, 4
        %s316 = smul.addr %s315, 3
        %s317 = smul.addr %s316, 8
        %s318 = scalar_lea.vmem %s0, %s317
        %p319 = pneg %p44
        %p320 = pneg %p41
        %p321 = pneg %p65
        %p322 = pneg %p62
        %p323 = pneg %p86
        %p324 = pneg %p83
        %p325 = pneg %p107
        %p326 = pneg %p104
        %p327 = pneg %p128
        %p328 = pneg %p125
        %p329 = pneg %p149
        %p330 = pneg %p146
        %p331 = pneg %p170
        %p332 = pneg %p167
        %p333 = pneg %p191
        %p334 = pneg %p188
        %p335 = pneg %p212
        %p336 = pneg %p209
        %p337 = pneg %p238
        %p338 = pneg %p235
        %s339 = sand.u32 %s225, 1
        %s340 = scalar_lea.sflag [#allocation3], %s339
        %s341 = sand.u32 %s225, 1
        %s342 = smul.addr %s341, 48
        %s343 = scalar_lea.vmem [#allocation2], %s342
        %s344 = smul.u32 2, %s23
        %s345 = ssub.s32 5, %s344
        %p346 = scmp.lt.s32.totalorder %s345, 2
        %s347 = scalar_select %p346, %s345, 2
        %s348 = smul.u32 128, %s347
        %s349 = smul.u32 %s348, 3
        %p350 = scmp.lt.s32.totalorder %s344, 4
        %s351 = scalar_select %p350, %s344, 4
        %s352 = smul.addr %s351, 3
        %s353 = smul.addr %s352, 8
        %s354 = scalar_lea.vmem %s0, %s353
        %s355 = smul.u32 2, %s23
        %s356 = ssub.s32 5, %s355
        %p357 = scmp.lt.s32.totalorder %s356, 2
        %s358 = scalar_select %p357, %s356, 2
        %s359 = smul.u32 128, %s358
        %s360 = smul.u32 %s359, 3
        %s361 = smul.u32 2, %s23
        %s362 = ssub.s32 5, %s361
        %p363 = scmp.lt.s32.totalorder %s362, 2
        %s364 = scalar_select %p363, %s362, 2
        %s365 = smul.u32 128, %s364
        %s366 = smul.u32 %s365, 3
        %v368 = vld [vmem:[%s354] sm:$0xff]
        %v369 = vld [vmem:[%s354 + $0x8] sm:$0xff]
        %v370 = vld [vmem:[%s354 + $0x10] sm:$0xff]
        %v371 = vld [vmem:[%s354 + $0x18] sm:$0xff]
        %v372 = vld [vmem:[%s354 + $0x20] sm:$0xff]
        %v373 = vld [vmem:[%s354 + $0x28] sm:$0xff]
        %v374 = vpack.c.bf16 %v371, %v368
        %v375 = vpack.c.bf16 %v372, %v369
        %v376 = vpack.c.bf16 %v373, %v370
        %v377 = vld [vmem:[%s1] sm:$0xff]
        %v378 = vld [vmem:[%s1 + $0x8] sm:$0xff]
        %v379 = vld [vmem:[%s1 + $0x10] sm:$0xff]
        %v380 = vld [vmem:[%s1 + $0x18] sm:$0xff]
        %v381 = vld [vmem:[%s1 + $0x20] sm:$0xff]
        %v382 = vld [vmem:[%s1 + $0x28] sm:$0xff]
        %v383 = vld [vmem:[%s1 + $0x30] sm:$0xff]
        %v384 = vld [vmem:[%s1 + $0x38] sm:$0xff]
        %v385 = vld [vmem:[%s1 + $0x40] sm:$0xff]
        %v386 = vld [vmem:[%s1 + $0x48] sm:$0xff]
        %v387 = vld [vmem:[%s1 + $0x50] sm:$0xff]
        %v388 = vld [vmem:[%s1 + $0x58] sm:$0xff]
        %v389 = vld [vmem:[%s1 + $0x60] sm:$0xff]
        %v390 = vld [vmem:[%s1 + $0x68] sm:$0xff]
        %v391 = vld [vmem:[%s1 + $0x70] sm:$0xff]
        %v392 = vld [vmem:[%s1 + $0x78] sm:$0xff]
        %v393 = vld [vmem:[%s1 + $0x80] sm:$0xff]
        %v394 = vld [vmem:[%s1 + $0x88] sm:$0xff]
        %v395 = vld [vmem:[%s1 + $0x90] sm:$0xff]
        %v396 = vld [vmem:[%s1 + $0x98] sm:$0xff]
        %v397 = vld [vmem:[%s1 + $0xa0] sm:$0xff]
        %v398 = vld [vmem:[%s1 + $0xa8] sm:$0xff]
        %v399 = vld [vmem:[%s1 + $0xb0] sm:$0xff]
        %v400 = vld [vmem:[%s1 + $0xb8] sm:$0xff]
        %v401 = vld [vmem:[%s1 + $0xc0] sm:$0xff]
        %v402 = vld [vmem:[%s1 + $0xc8] sm:$0xff]
        %v403 = vld [vmem:[%s1 + $0xd0] sm:$0xff]
        %v404 = vld [vmem:[%s1 + $0xd8] sm:$0xff]
        %v405 = vld [vmem:[%s1 + $0xe0] sm:$0xff]
        %v406 = vld [vmem:[%s1 + $0xe8] sm:$0xff]
        %v407 = vld [vmem:[%s1 + $0xf0] sm:$0xff]
        %v408 = vld [vmem:[%s1 + $0xf8] sm:$0xff]
        %v409 = vld [vmem:[%s1 + $0x100] sm:$0xff]
        %v410 = vld [vmem:[%s1 + $0x108] sm:$0xff]
        %v411 = vld [vmem:[%s1 + $0x110] sm:$0xff]
        %v412 = vld [vmem:[%s1 + $0x118] sm:$0xff]
        %v413 = vld [vmem:[%s1 + $0x120] sm:$0xff]
        %v414 = vld [vmem:[%s1 + $0x128] sm:$0x33]
        %v415 = vld [vmem:[%s2] sm:$0x3]
        %v417 = vlaneseq
        %v418 = vshrl.u32 %v417, 7
        %v419 = vsub.s32 0, %v418
        %v420 = vrot.slane %v415, %v419
        %v421 = vlaneseq
        %v422 = vshrl.u32 %v421, 7
        %v423 = vsub.s32 1, %v422
        %v424 = vrot.slane %v415, %v423
        %v465 = vunpack.c.l.b16 %v377
        %v466 = vunpack.c.h.b16 %v377
        %v467 = vunpack.c.l.b16 %v378
        %v468 = vunpack.c.h.b16 %v378
        %v469 = vunpack.c.l.b16 %v379
        %v470 = vunpack.c.h.b16 %v379
        %v471 = vunpack.c.l.b16 %v380
        %v472 = vunpack.c.h.b16 %v380
        %v473 = vunpack.c.l.b16 %v381
        %v474 = vunpack.c.h.b16 %v381
        %v475 = vunpack.c.l.b16 %v382
        %v476 = vunpack.c.h.b16 %v382
        %v477 = vunpack.c.l.b16 %v383
        %v478 = vunpack.c.h.b16 %v383
        %v479 = vunpack.c.l.b16 %v384
        %v480 = vunpack.c.h.b16 %v384
        %v481 = vunpack.c.l.b16 %v385
        %v482 = vunpack.c.h.b16 %v385
        %v483 = vunpack.c.l.b16 %v386
        %v484 = vunpack.c.h.b16 %v386
        %v485 = vunpack.c.l.b16 %v387
        %v486 = vunpack.c.h.b16 %v387
        %v487 = vunpack.c.l.b16 %v388
        %v488 = vunpack.c.h.b16 %v388
        %v489 = vunpack.c.l.b16 %v389
        %v490 = vunpack.c.h.b16 %v389
        %v491 = vunpack.c.l.b16 %v390
        %v492 = vunpack.c.h.b16 %v390
        %v493 = vunpack.c.l.b16 %v391
        %v494 = vunpack.c.h.b16 %v391
        %v495 = vunpack.c.l.b16 %v392
        %v496 = vunpack.c.h.b16 %v392
        %v497 = vunpack.c.l.b16 %v393
        %v498 = vunpack.c.h.b16 %v393
        %v499 = vunpack.c.l.b16 %v394
        %v500 = vunpack.c.h.b16 %v394
        %v501 = vunpack.c.l.b16 %v395
        %v502 = vunpack.c.h.b16 %v395
        %v503 = vunpack.c.l.b16 %v396
        %v504 = vunpack.c.h.b16 %v396
        %v505 = vunpack.c.l.b16 %v397
        %v506 = vunpack.c.h.b16 %v397
        %v507 = vunpack.c.l.b16 %v398
        %v508 = vunpack.c.h.b16 %v398
        %v509 = vunpack.c.l.b16 %v399
        %v510 = vunpack.c.h.b16 %v399
        %v511 = vunpack.c.l.b16 %v400
        %v512 = vunpack.c.h.b16 %v400
        %v513 = vunpack.c.l.b16 %v401
        %v514 = vunpack.c.h.b16 %v401
        %v515 = vunpack.c.l.b16 %v402
        %v516 = vunpack.c.h.b16 %v402
        %v517 = vunpack.c.l.b16 %v403
        %v518 = vunpack.c.h.b16 %v403
        %v519 = vunpack.c.l.b16 %v404
        %v520 = vunpack.c.h.b16 %v404
        %v521 = vunpack.c.l.b16 %v405
        %v522 = vunpack.c.h.b16 %v405
        %v523 = vunpack.c.l.b16 %v406
        %v524 = vunpack.c.h.b16 %v406
        %v525 = vunpack.c.l.b16 %v407
        %v526 = vunpack.c.h.b16 %v407
        %v527 = vunpack.c.l.b16 %v408
        %v528 = vunpack.c.h.b16 %v408
        %v529 = vunpack.c.l.b16 %v409
        %v530 = vunpack.c.h.b16 %v409
        %v531 = vunpack.c.l.b16 %v410
        %v532 = vunpack.c.h.b16 %v410
        %v533 = vunpack.c.l.b16 %v411
        %v534 = vunpack.c.h.b16 %v411
        %v535 = vunpack.c.l.b16 %v412
        %v536 = vunpack.c.h.b16 %v412
        %v537 = vunpack.c.l.b16 %v413
        %v538 = vunpack.c.h.b16 %v413
        %v539 = vunpack.c.l.b16 %v414
        %v540 = vunpack.c.h.b16 %v414
        %v541 = vpack.c.b16 %v467, %v465
        %v542 = vpack.c.b16 %v468, %v466
        %v543 = vpack.c.b16 %v471, %v469
        %v544 = vpack.c.b16 %v472, %v470
        %v545 = vpack.c.b16 %v475, %v473
        %v546 = vpack.c.b16 %v476, %v474
        %v547 = vpack.c.b16 %v479, %v477
        %v548 = vpack.c.b16 %v480, %v478
        %v549 = vpack.c.b16 %v483, %v481
        %v550 = vpack.c.b16 %v484, %v482
        %v551 = vpack.c.b16 %v487, %v485
        %v552 = vpack.c.b16 %v488, %v486
        %v553 = vpack.c.b16 %v491, %v489
        %v554 = vpack.c.b16 %v492, %v490
        %v555 = vpack.c.b16 %v495, %v493
        %v556 = vpack.c.b16 %v496, %v494
        %v557 = vpack.c.b16 %v499, %v497
        %v558 = vpack.c.b16 %v500, %v498
        %v559 = vpack.c.b16 %v503, %v501
        %v560 = vpack.c.b16 %v504, %v502
        %v561 = vpack.c.b16 %v507, %v505
        %v562 = vpack.c.b16 %v508, %v506
        %v563 = vpack.c.b16 %v511, %v509
        %v564 = vpack.c.b16 %v512, %v510
        %v565 = vpack.c.b16 %v515, %v513
        %v566 = vpack.c.b16 %v516, %v514
        %v567 = vpack.c.b16 %v519, %v517
        %v568 = vpack.c.b16 %v520, %v518
        %v569 = vpack.c.b16 %v523, %v521
        %v570 = vpack.c.b16 %v524, %v522
        %v571 = vpack.c.b16 %v527, %v525
        %v572 = vpack.c.b16 %v528, %v526
        %v573 = vpack.c.b16 %v531, %v529
        %v574 = vpack.c.b16 %v532, %v530
        %v575 = vpack.c.b16 %v535, %v533
        %v576 = vpack.c.b16 %v536, %v534
        %v577 = vpack.c.b16 %v539, %v537
        %v578 = vpack.c.b16 %v540, %v538
        %vm615 = vcmask 359424
        %v617 = vsel %vm615, %v376, 0
        %vm619 = vcmask 1045504
        %v621 = vsel %vm619, %v577, 0
        %v624 = vsel %vm619, %v578, 0
        %626 = vmatprep.subr.bf16.mxu0 %v542
        %627 = vmatpush1.bf16.msra.mxu0 %v541
        %628 = vmatprep.subr.bf16.mxu0 %v544
        %629 = vmatpush1.bf16.msra.mxu0 %v543
        %630 = vmatprep.subr.bf16.mxu0 %v546
        %631 = vmatpush1.bf16.msra.mxu0 %v545
        %632 = vmatprep.subr.bf16.mxu0 %v548
        %633 = vmatpush1.bf16.msra.mxu0 %v547
        %634 = vmatprep.subr.bf16.mxu0 %v550
        %635 = vmatpush1.bf16.msra.mxu0 %v549
        %636 = vmatprep.subr.bf16.mxu0 %v552
        %637 = vmatpush1.bf16.msra.mxu0 %v551
        %638 = vmatprep.subr.bf16.mxu0 %v554
        %639 = vmatpush1.bf16.msra.mxu0 %v553
        %640 = vmatprep.subr.bf16.mxu0 %v556
        %641 = vmatpush1.bf16.msra.mxu0 %v555
        %642 = vmatprep.subr.bf16.mxu0 %v558
        %643 = vmatpush1.bf16.msra.mxu0 %v557
        %644 = vmatprep.subr.bf16.mxu0 %v560
        %645 = vmatpush1.bf16.msra.mxu0 %v559
        %646 = vmatprep.subr.bf16.mxu0 %v562
        %647 = vmatpush1.bf16.msra.mxu0 %v561
        %648 = vmatprep.subr.bf16.mxu0 %v564
        %649 = vmatpush1.bf16.msra.mxu0 %v563
        %650 = vmatprep.subr.bf16.mxu0 %v566
        %651 = vmatpush1.bf16.msra.mxu0 %v565
        %652 = vmatprep.subr.bf16.mxu0 %v568
        %653 = vmatpush1.bf16.msra.mxu0 %v567
        %654 = vmatprep.subr.bf16.mxu0 %v570
        %655 = vmatpush1.bf16.msra.mxu0 %v569
        %656 = vmatprep.subr.bf16.mxu0 %v572
        %657 = vmatpush1.bf16.msra.mxu0 %v571
        %658 = vmatprep.mubr.bf16.mxu0 %v375
        %659 = vmatmul.mubr.bf16.gmra.mrb[0].mxu0 %v374
        %v660 = vpop.f32.mrb[0].mxu0
        %v661 = vadd.f32 %v420, %v660
        %v662 = vpop.f32.mrb[0].mxu0
        %v663 = vadd.f32 %v424, %v662
        %v664 = vpop.f32.mrb[0].mxu0
        %v665 = vadd.f32 %v420, %v664
        %v666 = vpop.f32.mrb[0].mxu0
        %v667 = vadd.f32 %v424, %v666
        %668 = vdwg.mxu0
        %669 = vmatprep.subr.bf16.mxu0 %v574
        %670 = vmatpush1.bf16.msra.mxu0 %v573
        %671 = vmatprep.subr.bf16.mxu0 %v576
        %672 = vmatpush1.bf16.msra.mxu0 %v575
        %673 = vmatprep.subr.bf16.mxu0 %v624
        %674 = vmatpush1.bf16.msra.mxu0 %v621
        %675 = vmatprep.subr.bf16.mxu0 0
        %676 = vmatpush1.bf16.msra.mxu0 0
        %677 = vmatprep.subr.bf16.mxu0 0
        %678 = vmatpush1.bf16.msra.mxu0 0
        %679 = vmatprep.subr.bf16.mxu0 0
        %680 = vmatpush1.bf16.msra.mxu0 0
        %681 = vmatprep.subr.bf16.mxu0 0
        %682 = vmatpush1.bf16.msra.mxu0 0
        %683 = vmatprep.subr.bf16.mxu0 0
        %684 = vmatpush1.bf16.msra.mxu0 0
        %685 = vmatprep.subr.bf16.mxu0 0
        %686 = vmatpush1.bf16.msra.mxu0 0
        %687 = vmatprep.subr.bf16.mxu0 0
        %688 = vmatpush1.bf16.msra.mxu0 0
        %689 = vmatprep.subr.bf16.mxu0 0
        %690 = vmatpush1.bf16.msra.mxu0 0
        %691 = vmatprep.subr.bf16.mxu0 0
        %692 = vmatpush1.bf16.msra.mxu0 0
        %693 = vmatprep.subr.bf16.mxu0 0
        %694 = vmatpush1.bf16.msra.mxu0 0
        %695 = vmatprep.subr.bf16.mxu0 0
        %696 = vmatpush1.bf16.msra.mxu0 0
        %697 = vmatprep.subr.bf16.mxu0 0
        %698 = vmatpush1.bf16.msra.mxu0 0
        %699 = vmatprep.subr.bf16.mxu0 0
        %700 = vmatpush1.bf16.msra.mxu0 0
        %701 = vmatprep.mubr.bf16.mxu0 0
        %702 = vmatmul.mubr.bf16.gmra.mrb[0].mxu0 %v617
        %v703 = vpop.f32.mrb[0].mxu0
        %v704 = vadd.f32 %v661, %v703
        %v705 = vpop.f32.mrb[0].mxu0
        %v706 = vadd.f32 %v663, %v705
        %v707 = vpop.f32.mrb[0].mxu0
        %v708 = vadd.f32 %v665, %v707
        %v709 = vpop.f32.mrb[0].mxu0
        %v710 = vadd.f32 %v667, %v709
        %711 = vdwg.mxu0
        %v712 = vmax.f32 %v704, 0.0
        %v713 = vmax.f32 %v706, 0.0
        %v714 = vmax.f32 %v708, 0.0
        %v715 = vmax.f32 %v710, 0.0
        %v716 = vpack.c.bf16 %v714, %v712
        %v717 = vpack.c.bf16 %v715, %v713
        %v718 = vld [vmem:[%s3] sm:$0xf]
        %v719 = vld [vmem:[%s3 + $0x4] sm:$0xf]
        %v720 = vld [vmem:[%s3 + $0x8] sm:$0xf]
        %v721 = vld [vmem:[%s3 + $0xc] sm:$0xf]
        %v722 = vld [vmem:[%s3 + $0x10] sm:$0xf]
        %v723 = vld [vmem:[%s3 + $0x14] sm:$0xf]
        %v724 = vld [vmem:[%s3 + $0x18] sm:$0xf]
        %v725 = vld [vmem:[%s3 + $0x1c] sm:$0xf]
        %v726 = vld [vmem:[%s3 + $0x20] sm:$0xf]
        %v727 = vld [vmem:[%s3 + $0x24] sm:$0xf]
        %v728 = vld [vmem:[%s3 + $0x28] sm:$0xf]
        %v729 = vld [vmem:[%s3 + $0x2c] sm:$0xf]
        %v730 = vld [vmem:[%s3 + $0x30] sm:$0xf]
        %v731 = vld [vmem:[%s3 + $0x34] sm:$0xf]
        %v732 = vld [vmem:[%s3 + $0x38] sm:$0xf]
        %v733 = vld [vmem:[%s3 + $0x3c] sm:$0xf]
        %v734 = vld [vmem:[%s3 + $0x40] sm:$0xf]
        %v735 = vld [vmem:[%s3 + $0x44] sm:$0xf]
        %v736 = vld [vmem:[%s3 + $0x48] sm:$0xf]
        %v737 = vld [vmem:[%s3 + $0x4c] sm:$0xf]
        %v738 = vld [vmem:[%s3 + $0x50] sm:$0xf]
        %v739 = vld [vmem:[%s3 + $0x54] sm:$0xf]
        %v740 = vld [vmem:[%s3 + $0x58] sm:$0xf]
        %v741 = vld [vmem:[%s3 + $0x5c] sm:$0xf]
        %v742 = vld [vmem:[%s3 + $0x60] sm:$0xf]
        %v743 = vld [vmem:[%s4] sm:$0x1]
        %v745 = vlaneseq
        %v746 = vshrl.u32 %v745, 7
        %v747 = vsub.s32 0, %v746
        %v748 = vrot.slane %v743, %v747
        %v775 = vunpack.c.l.b16 %v718
        %v776 = vunpack.c.l.b16 %v719
        %v777 = vunpack.c.l.b16 %v720
        %v778 = vunpack.c.l.b16 %v721
        %v779 = vunpack.c.l.b16 %v722
        %v780 = vunpack.c.l.b16 %v723
        %v781 = vunpack.c.l.b16 %v724
        %v782 = vunpack.c.l.b16 %v725
        %v783 = vunpack.c.l.b16 %v726
        %v784 = vunpack.c.l.b16 %v727
        %v785 = vunpack.c.l.b16 %v728
        %v786 = vunpack.c.l.b16 %v729
        %v787 = vunpack.c.l.b16 %v730
        %v788 = vunpack.c.l.b16 %v731
        %v789 = vunpack.c.l.b16 %v732
        %v790 = vunpack.c.l.b16 %v733
        %v791 = vunpack.c.l.b16 %v734
        %v792 = vunpack.c.l.b16 %v735
        %v793 = vunpack.c.l.b16 %v736
        %v794 = vunpack.c.l.b16 %v737
        %v795 = vunpack.c.l.b16 %v738
        %v796 = vunpack.c.l.b16 %v739
        %v797 = vunpack.c.l.b16 %v740
        %v798 = vunpack.c.l.b16 %v741
        %v799 = vunpack.c.l.b16 %v742
        %v800 = vpack.c.b16 %v776, %v775
        %v801 = vpack.c.b16 %v778, %v777
        %v802 = vpack.c.b16 %v780, %v779
        %v803 = vpack.c.b16 %v782, %v781
        %v804 = vpack.c.b16 %v784, %v783
        %v805 = vpack.c.b16 %v786, %v785
        %v806 = vpack.c.b16 %v788, %v787
        %v807 = vpack.c.b16 %v790, %v789
        %v808 = vpack.c.b16 %v792, %v791
        %v809 = vpack.c.b16 %v794, %v793
        %v810 = vpack.c.b16 %v796, %v795
        %v811 = vpack.c.b16 %v798, %v797
        %v812 = vpack.c.b16 %v799, %v799
        %vm825 = vcmask 588800
        %v827 = vsel %vm825, %v717, 0
        %vm829 = vcmask 1043456
        %v831 = vsel %vm829, %v812, 0
        %833 = vmatprep.subr.bf16.mxu0 0
        %834 = vmatpush1.bf16.msra.mxu0 %v800
        %835 = vmatprep.subr.bf16.mxu0 0
        %836 = vmatpush1.bf16.msra.mxu0 %v801
        %837 = vmatprep.subr.bf16.mxu0 0
        %838 = vmatpush1.bf16.msra.mxu0 %v802
        %839 = vmatprep.subr.bf16.mxu0 0
        %840 = vmatpush1.bf16.msra.mxu0 %v803
        %841 = vmatprep.subr.bf16.mxu0 0
        %842 = vmatpush1.bf16.msra.mxu0 %v804
        %843 = vmatprep.subr.bf16.mxu0 0
        %844 = vmatpush1.bf16.msra.mxu0 %v805
        %845 = vmatprep.subr.bf16.mxu0 0
        %846 = vmatpush1.bf16.msra.mxu0 %v806
        %847 = vmatprep.subr.bf16.mxu0 0
        %848 = vmatpush1.bf16.msra.mxu0 %v807
        %849 = vmatprep.subr.bf16.mxu0 0
        %850 = vmatpush1.bf16.msra.mxu0 %v808
        %851 = vmatprep.subr.bf16.mxu0 0
        %852 = vmatpush1.bf16.msra.mxu0 %v809
        %853 = vmatprep.subr.bf16.mxu0 0
        %854 = vmatpush1.bf16.msra.mxu0 %v810
        %855 = vmatprep.subr.bf16.mxu0 0
        %856 = vmatpush1.bf16.msra.mxu0 %v811
        %857 = vmatprep.subr.bf16.mxu0 0
        %858 = vmatpush1.bf16.msra.mxu0 %v831
        %859 = vmatprep.subr.bf16.mxu0 0
        %860 = vmatpush1.bf16.msra.mxu0 0
        %861 = vmatprep.subr.bf16.mxu0 0
        %862 = vmatpush1.bf16.msra.mxu0 0
        %863 = vmatprep.subr.bf16.mxu0 0
        %864 = vmatpush1.bf16.msra.mxu0 0
        %865 = vmatprep.mubr.bf16.mxu0 %v827
        %866 = vmatmul.mubr.bf16.gmra.mrb[0].mxu0 %v716
        %v867 = vpop.f32.mrb[0].mxu0
        %v868 = vadd.f32 %v748, %v867
        %v869 = vpop.f32.mrb[0].mxu0
        %v870 = vpop.f32.mrb[0].mxu0
        %v871 = vadd.f32 %v748, %v870
        %v872 = vpop.f32.mrb[0].mxu0
        %873 = vdwg.mxu0
        %v874 = vmul.f32 %v868, %v868
        %v875 = vmul.f32 %v871, %v871
        %vm876 = vcmask 818176
        %v877 = vsel %vm876, %v874, 0.0
        %878 = vadd.xlane.f32.xlu0 %v877
        %v879 = vpop.xlane.xlu0 %878
        %v880 = vsel %vm876, %v875, 0.0
        %881 = vadd.xlane.f32.xlu0 %v880
        %v882 = vpop.xlane.xlu0 %881
        %v883 = vmax.f32 %v879, 1e-24
        %v884 = vmax.f32 %v882, 1e-24
        %v885 = vrsqrt.pop %v883
        %v886 = vrsqrt.pop %v884
        %v887 = vmul.f32 %v868, %v885
        %v888 = vmul.f32 %v871, %v886
        %v889 = vpack.c.bf16 %v888, %v887
        %v890 = vld [vmem:[%s5] sm:$0xff]
        %v891 = vld [vmem:[%s5 + $0x8] sm:$0xff]
        %v892 = vld [vmem:[%s5 + $0x10] sm:$0xff]
        %v893 = vld [vmem:[%s5 + $0x18] sm:$0xff]
        %v894 = vld [vmem:[%s5 + $0x20] sm:$0xff]
        %v895 = vld [vmem:[%s5 + $0x28] sm:$0xff]
        %v896 = vld [vmem:[%s5 + $0x30] sm:$0xff]
        %v897 = vld [vmem:[%s5 + $0x38] sm:$0xff]
        %v898 = vld [vmem:[%s5 + $0x40] sm:$0xff]
        %v899 = vld [vmem:[%s5 + $0x48] sm:$0xff]
        %v900 = vld [vmem:[%s5 + $0x50] sm:$0xff]
        %v901 = vld [vmem:[%s5 + $0x58] sm:$0xff]
        %v902 = vld [vmem:[%s5 + $0x60] sm:$0x33]
        %v903 = vld [vmem:[%s6] sm:$0x3]
        %v905 = vlaneseq
        %v906 = vshrl.u32 %v905, 7
        %v907 = vsub.s32 0, %v906
        %v908 = vrot.slane %v903, %v907
        %v909 = vlaneseq
        %v910 = vshrl.u32 %v909, 7
        %v911 = vsub.s32 1, %v910
        %v912 = vrot.slane %v903, %v911
        %v928 = vunpack.c.l.b16 %v890
        %v929 = vunpack.c.h.b16 %v890
        %v930 = vunpack.c.l.b16 %v891
        %v931 = vunpack.c.h.b16 %v891
        %v932 = vunpack.c.l.b16 %v892
        %v933 = vunpack.c.h.b16 %v892
        %v934 = vunpack.c.l.b16 %v893
        %v935 = vunpack.c.h.b16 %v893
        %v936 = vunpack.c.l.b16 %v894
        %v937 = vunpack.c.h.b16 %v894
        %v938 = vunpack.c.l.b16 %v895
        %v939 = vunpack.c.h.b16 %v895
        %v940 = vunpack.c.l.b16 %v896
        %v941 = vunpack.c.h.b16 %v896
        %v942 = vunpack.c.l.b16 %v897
        %v943 = vunpack.c.h.b16 %v897
        %v944 = vunpack.c.l.b16 %v898
        %v945 = vunpack.c.h.b16 %v898
        %v946 = vunpack.c.l.b16 %v899
        %v947 = vunpack.c.h.b16 %v899
        %v948 = vunpack.c.l.b16 %v900
        %v949 = vunpack.c.h.b16 %v900
        %v950 = vunpack.c.l.b16 %v901
        %v951 = vunpack.c.h.b16 %v901
        %v952 = vunpack.c.l.b16 %v902
        %v953 = vunpack.c.h.b16 %v902
        %v954 = vpack.c.b16 %v930, %v928
        %v955 = vpack.c.b16 %v931, %v929
        %v956 = vpack.c.b16 %v934, %v932
        %v957 = vpack.c.b16 %v935, %v933
        %v958 = vpack.c.b16 %v938, %v936
        %v959 = vpack.c.b16 %v939, %v937
        %v960 = vpack.c.b16 %v942, %v940
        %v961 = vpack.c.b16 %v943, %v941
        %v962 = vpack.c.b16 %v946, %v944
        %v963 = vpack.c.b16 %v947, %v945
        %v964 = vpack.c.b16 %v950, %v948
        %v965 = vpack.c.b16 %v951, %v949
        %v966 = vpack.c.b16 %v952, %v952
        %v967 = vpack.c.b16 %v953, %v953
        %v981 = vsel %vm876, %v889, 0
        %vm983 = vcmask 1041408
        %v985 = vsel %vm983, %v966, 0
        %v988 = vsel %vm983, %v967, 0
        %990 = vmatprep.subr.bf16.mxu0 %v955
        %991 = vmatpush1.bf16.msra.mxu0 %v954
        %992 = vmatprep.subr.bf16.mxu0 %v957
        %993 = vmatpush1.bf16.msra.mxu0 %v956
        %994 = vmatprep.subr.bf16.mxu0 %v959
        %995 = vmatpush1.bf16.msra.mxu0 %v958
        %996 = vmatprep.subr.bf16.mxu0 %v961
        %997 = vmatpush1.bf16.msra.mxu0 %v960
        %998 = vmatprep.subr.bf16.mxu0 %v963
        %999 = vmatpush1.bf16.msra.mxu0 %v962
        %1000 = vmatprep.subr.bf16.mxu0 %v965
        %1001 = vmatpush1.bf16.msra.mxu0 %v964
        %1002 = vmatprep.subr.bf16.mxu0 %v988
        %1003 = vmatpush1.bf16.msra.mxu0 %v985
        %1004 = vmatprep.subr.bf16.mxu0 0
        %1005 = vmatpush1.bf16.msra.mxu0 0
        %1006 = vmatprep.subr.bf16.mxu0 0
        %1007 = vmatpush1.bf16.msra.mxu0 0
        %1008 = vmatprep.subr.bf16.mxu0 0
        %1009 = vmatpush1.bf16.msra.mxu0 0
        %1010 = vmatprep.subr.bf16.mxu0 0
        %1011 = vmatpush1.bf16.msra.mxu0 0
        %1012 = vmatprep.subr.bf16.mxu0 0
        %1013 = vmatpush1.bf16.msra.mxu0 0
        %1014 = vmatprep.subr.bf16.mxu0 0
        %1015 = vmatpush1.bf16.msra.mxu0 0
        %1016 = vmatprep.subr.bf16.mxu0 0
        %1017 = vmatpush1.bf16.msra.mxu0 0
        %1018 = vmatprep.subr.bf16.mxu0 0
        %1019 = vmatpush1.bf16.msra.mxu0 0
        %1020 = vmatprep.subr.bf16.mxu0 0
        %1021 = vmatpush1.bf16.msra.mxu0 0
        %1022 = vmatprep.mubr.bf16.mxu0 0
        %1023 = vmatmul.mubr.bf16.gmra.mrb[0].mxu0 %v981
        %v1024 = vpop.f32.mrb[0].mxu0
        %v1025 = vadd.f32 %v908, %v1024
        %v1026 = vpop.f32.mrb[0].mxu0
        %v1027 = vadd.f32 %v912, %v1026
        %v1028 = vpop.f32.mrb[0].mxu0
        %v1029 = vadd.f32 %v908, %v1028
        %v1030 = vpop.f32.mrb[0].mxu0
        %v1031 = vadd.f32 %v912, %v1030
        %1032 = vdwg.mxu0
        %v1033 = vmax.f32 %v1025, 0.0
        %v1034 = vmax.f32 %v1027, 0.0
        %v1035 = vmax.f32 %v1029, 0.0
        %v1036 = vmax.f32 %v1031, 0.0
        %v1037 = vpack.c.bf16 %v1035, %v1033
        %v1038 = vpack.c.bf16 %v1036, %v1034
        %v1039 = vld [vmem:[%s7] sm:$0xff]
        %v1040 = vld [vmem:[%s7 + $0x8] sm:$0xf]
        %v1041 = vld [vmem:[%s7 + $0xc] sm:$0xff]
        %v1042 = vld [vmem:[%s7 + $0x14] sm:$0xf]
        %v1043 = vld [vmem:[%s7 + $0x18] sm:$0xff]
        %v1044 = vld [vmem:[%s7 + $0x20] sm:$0xf]
        %v1045 = vld [vmem:[%s7 + $0x24] sm:$0xff]
        %v1046 = vld [vmem:[%s7 + $0x2c] sm:$0xf]
        %v1047 = vld [vmem:[%s7 + $0x30] sm:$0xff]
        %v1048 = vld [vmem:[%s7 + $0x38] sm:$0xf]
        %v1049 = vld [vmem:[%s7 + $0x3c] sm:$0xff]
        %v1050 = vld [vmem:[%s7 + $0x44] sm:$0xf]
        %v1051 = vld [vmem:[%s7 + $0x48] sm:$0xff]
        %v1052 = vld [vmem:[%s7 + $0x50] sm:$0xf]
        %v1053 = vld [vmem:[%s7 + $0x54] sm:$0xff]
        %v1054 = vld [vmem:[%s7 + $0x5c] sm:$0xf]
        %v1055 = vld [vmem:[%s7 + $0x60] sm:$0xff]
        %v1056 = vld [vmem:[%s7 + $0x68] sm:$0xf]
        %v1057 = vld [vmem:[%s7 + $0x6c] sm:$0xff]
        %v1058 = vld [vmem:[%s7 + $0x74] sm:$0xf]
        %v1059 = vld [vmem:[%s7 + $0x78] sm:$0xff]
        %v1060 = vld [vmem:[%s7 + $0x80] sm:$0xf]
        %v1061 = vld [vmem:[%s7 + $0x84] sm:$0xff]
        %v1062 = vld [vmem:[%s7 + $0x8c] sm:$0xf]
        %v1063 = vld [vmem:[%s7 + $0x90] sm:$0xff]
        %v1064 = vld [vmem:[%s7 + $0x98] sm:$0xf]
        %v1065 = vld [vmem:[%s7 + $0x9c] sm:$0xff]
        %v1066 = vld [vmem:[%s7 + $0xa4] sm:$0xf]
        %v1067 = vld [vmem:[%s7 + $0xa8] sm:$0xff]
        %v1068 = vld [vmem:[%s7 + $0xb0] sm:$0xf]
        %v1069 = vld [vmem:[%s7 + $0xb4] sm:$0xff]
        %v1070 = vld [vmem:[%s7 + $0xbc] sm:$0xf]
        %v1071 = vld [vmem:[%s7 + $0xc0] sm:$0xff]
        %v1072 = vld [vmem:[%s7 + $0xc8] sm:$0xf]
        %v1073 = vld [vmem:[%s7 + $0xcc] sm:$0xff]
        %v1074 = vld [vmem:[%s7 + $0xd4] sm:$0xf]
        %v1075 = vld [vmem:[%s7 + $0xd8] sm:$0xff]
        %v1076 = vld [vmem:[%s7 + $0xe0] sm:$0xf]
        %v1077 = vld [vmem:[%s7 + $0xe4] sm:$0xff]
        %v1078 = vld [vmem:[%s7 + $0xec] sm:$0xf]
        %v1079 = vld [vmem:[%s7 + $0xf0] sm:$0xff]
        %v1080 = vld [vmem:[%s7 + $0xf8] sm:$0xf]
        %v1081 = vld [vmem:[%s7 + $0xfc] sm:$0xff]
        %v1082 = vld [vmem:[%s7 + $0x104] sm:$0xf]
        %v1083 = vld [vmem:[%s7 + $0x108] sm:$0xff]
        %v1084 = vld [vmem:[%s7 + $0x110] sm:$0xf]
        %v1085 = vld [vmem:[%s7 + $0x114] sm:$0xff]
        %v1086 = vld [vmem:[%s7 + $0x11c] sm:$0xf]
        %v1087 = vld [vmem:[%s7 + $0x120] sm:$0xff]
        %v1088 = vld [vmem:[%s7 + $0x128] sm:$0xf]
        %v1089 = vld [vmem:[%s8] sm:$0x7]
        %v1091 = vlaneseq
        %v1092 = vshrl.u32 %v1091, 7
        %v1093 = vsub.s32 0, %v1092
        %v1094 = vrot.slane %v1089, %v1093
        %v1095 = vlaneseq
        %v1096 = vshrl.u32 %v1095, 7
        %v1097 = vsub.s32 1, %v1096
        %v1098 = vrot.slane %v1089, %v1097
        %v1099 = vlaneseq
        %v1100 = vshrl.u32 %v1099, 7
        %v1101 = vsub.s32 2, %v1100
        %v1102 = vrot.slane %v1089, %v1101
        %v1156 = vunpack.c.l.b16 %v1039
        %v1157 = vunpack.c.h.b16 %v1039
        %v1158 = vunpack.c.l.b16 %v1040
        %v1159 = vunpack.c.l.b16 %v1041
        %v1160 = vunpack.c.h.b16 %v1041
        %v1161 = vunpack.c.l.b16 %v1042
        %v1162 = vunpack.c.l.b16 %v1043
        %v1163 = vunpack.c.h.b16 %v1043
        %v1164 = vunpack.c.l.b16 %v1044
        %v1165 = vunpack.c.l.b16 %v1045
        %v1166 = vunpack.c.h.b16 %v1045
        %v1167 = vunpack.c.l.b16 %v1046
        %v1168 = vunpack.c.l.b16 %v1047
        %v1169 = vunpack.c.h.b16 %v1047
        %v1170 = vunpack.c.l.b16 %v1048
        %v1171 = vunpack.c.l.b16 %v1049
        %v1172 = vunpack.c.h.b16 %v1049
        %v1173 = vunpack.c.l.b16 %v1050
        %v1174 = vunpack.c.l.b16 %v1051
        %v1175 = vunpack.c.h.b16 %v1051
        %v1176 = vunpack.c.l.b16 %v1052
        %v1177 = vunpack.c.l.b16 %v1053
        %v1178 = vunpack.c.h.b16 %v1053
        %v1179 = vunpack.c.l.b16 %v1054
        %v1180 = vunpack.c.l.b16 %v1055
        %v1181 = vunpack.c.h.b16 %v1055
        %v1182 = vunpack.c.l.b16 %v1056
        %v1183 = vunpack.c.l.b16 %v1057
        %v1184 = vunpack.c.h.b16 %v1057
        %v1185 = vunpack.c.l.b16 %v1058
        %v1186 = vunpack.c.l.b16 %v1059
        %v1187 = vunpack.c.h.b16 %v1059
        %v1188 = vunpack.c.l.b16 %v1060
        %v1189 = vunpack.c.l.b16 %v1061
        %v1190 = vunpack.c.h.b16 %v1061
        %v1191 = vunpack.c.l.b16 %v1062
        %v1192 = vunpack.c.l.b16 %v1063
        %v1193 = vunpack.c.h.b16 %v1063
        %v1194 = vunpack.c.l.b16 %v1064
        %v1195 = vunpack.c.l.b16 %v1065
        %v1196 = vunpack.c.h.b16 %v1065
        %v1197 = vunpack.c.l.b16 %v1066
        %v1198 = vunpack.c.l.b16 %v1067
        %v1199 = vunpack.c.h.b16 %v1067
        %v1200 = vunpack.c.l.b16 %v1068
        %v1201 = vunpack.c.l.b16 %v1069
        %v1202 = vunpack.c.h.b16 %v1069
        %v1203 = vunpack.c.l.b16 %v1070
        %v1204 = vunpack.c.l.b16 %v1071
        %v1205 = vunpack.c.h.b16 %v1071
        %v1206 = vunpack.c.l.b16 %v1072
        %v1207 = vunpack.c.l.b16 %v1073
        %v1208 = vunpack.c.h.b16 %v1073
        %v1209 = vunpack.c.l.b16 %v1074
        %v1210 = vunpack.c.l.b16 %v1075
        %v1211 = vunpack.c.h.b16 %v1075
        %v1212 = vunpack.c.l.b16 %v1076
        %v1213 = vunpack.c.l.b16 %v1077
        %v1214 = vunpack.c.h.b16 %v1077
        %v1215 = vunpack.c.l.b16 %v1078
        %v1216 = vunpack.c.l.b16 %v1079
        %v1217 = vunpack.c.h.b16 %v1079
        %v1218 = vunpack.c.l.b16 %v1080
        %v1219 = vunpack.c.l.b16 %v1081
        %v1220 = vunpack.c.h.b16 %v1081
        %v1221 = vunpack.c.l.b16 %v1082
        %v1222 = vunpack.c.l.b16 %v1083
        %v1223 = vunpack.c.h.b16 %v1083
        %v1224 = vunpack.c.l.b16 %v1084
        %v1225 = vunpack.c.l.b16 %v1085
        %v1226 = vunpack.c.h.b16 %v1085
        %v1227 = vunpack.c.l.b16 %v1086
        %v1228 = vunpack.c.l.b16 %v1087
        %v1229 = vunpack.c.h.b16 %v1087
        %v1230 = vunpack.c.l.b16 %v1088
        %v1231 = vpack.c.b16 %v1159, %v1156
        %v1232 = vpack.c.b16 %v1160, %v1157
        %v1233 = vpack.c.b16 %v1161, %v1158
        %v1234 = vpack.c.b16 %v1165, %v1162
        %v1235 = vpack.c.b16 %v1166, %v1163
        %v1236 = vpack.c.b16 %v1167, %v1164
        %v1237 = vpack.c.b16 %v1171, %v1168
        %v1238 = vpack.c.b16 %v1172, %v1169
        %v1239 = vpack.c.b16 %v1173, %v1170
        %v1240 = vpack.c.b16 %v1177, %v1174
        %v1241 = vpack.c.b16 %v1178, %v1175
        %v1242 = vpack.c.b16 %v1179, %v1176
        %v1243 = vpack.c.b16 %v1183, %v1180
        %v1244 = vpack.c.b16 %v1184, %v1181
        %v1245 = vpack.c.b16 %v1185, %v1182
        %v1246 = vpack.c.b16 %v1189, %v1186
        %v1247 = vpack.c.b16 %v1190, %v1187
        %v1248 = vpack.c.b16 %v1191, %v1188
        %v1249 = vpack.c.b16 %v1195, %v1192
        %v1250 = vpack.c.b16 %v1196, %v1193
        %v1251 = vpack.c.b16 %v1197, %v1194
        %v1252 = vpack.c.b16 %v1201, %v1198
        %v1253 = vpack.c.b16 %v1202, %v1199
        %v1254 = vpack.c.b16 %v1203, %v1200
        %v1255 = vpack.c.b16 %v1207, %v1204
        %v1256 = vpack.c.b16 %v1208, %v1205
        %v1257 = vpack.c.b16 %v1209, %v1206
        %v1258 = vpack.c.b16 %v1213, %v1210
        %v1259 = vpack.c.b16 %v1214, %v1211
        %v1260 = vpack.c.b16 %v1215, %v1212
        %v1261 = vpack.c.b16 %v1219, %v1216
        %v1262 = vpack.c.b16 %v1220, %v1217
        %v1263 = vpack.c.b16 %v1221, %v1218
        %v1264 = vpack.c.b16 %v1225, %v1222
        %v1265 = vpack.c.b16 %v1226, %v1223
        %v1266 = vpack.c.b16 %v1227, %v1224
        %v1267 = vpack.c.b16 %v1228, %v1228
        %v1268 = vpack.c.b16 %v1229, %v1229
        %v1269 = vpack.c.b16 %v1230, %v1230
        %v1307 = vsel %vm825, %v1038, 0
        %v1310 = vsel %vm829, %v1267, 0
        %v1313 = vsel %vm829, %v1268, 0
        %v1316 = vsel %vm829, %v1269, 0
        %1318 = vmatprep.subr.bf16.mxu0 %v1232
        %1319 = vmatpush1.bf16.msra.mxu0 %v1231
        %1320 = vmatprep.subr.bf16.mxu0 %v1235
        %1321 = vmatpush1.bf16.msra.mxu0 %v1234
        %1322 = vmatprep.subr.bf16.mxu0 %v1238
        %1323 = vmatpush1.bf16.msra.mxu0 %v1237
        %1324 = vmatprep.subr.bf16.mxu0 %v1241
        %1325 = vmatpush1.bf16.msra.mxu0 %v1240
        %1326 = vmatprep.subr.bf16.mxu0 %v1244
        %1327 = vmatpush1.bf16.msra.mxu0 %v1243
        %1328 = vmatprep.subr.bf16.mxu0 %v1247
        %1329 = vmatpush1.bf16.msra.mxu0 %v1246
        %1330 = vmatprep.subr.bf16.mxu0 %v1250
        %1331 = vmatpush1.bf16.msra.mxu0 %v1249
        %1332 = vmatprep.subr.bf16.mxu0 %v1253
        %1333 = vmatpush1.bf16.msra.mxu0 %v1252
        %1334 = vmatprep.subr.bf16.mxu0 %v1256
        %1335 = vmatpush1.bf16.msra.mxu0 %v1255
        %1336 = vmatprep.subr.bf16.mxu0 %v1259
        %1337 = vmatpush1.bf16.msra.mxu0 %v1258
        %1338 = vmatprep.subr.bf16.mxu0 %v1262
        %1339 = vmatpush1.bf16.msra.mxu0 %v1261
        %1340 = vmatprep.subr.bf16.mxu0 %v1265
        %1341 = vmatpush1.bf16.msra.mxu0 %v1264
        %1342 = vmatprep.subr.bf16.mxu0 %v1313
        %1343 = vmatpush1.bf16.msra.mxu0 %v1310
        %1344 = vmatprep.subr.bf16.mxu0 0
        %1345 = vmatpush1.bf16.msra.mxu0 0
        %1346 = vmatprep.subr.bf16.mxu0 0
        %1347 = vmatpush1.bf16.msra.mxu0 0
        %1348 = vmatprep.subr.bf16.mxu0 0
        %1349 = vmatpush1.bf16.msra.mxu0 0
        %1350 = vmatprep.mubr.bf16.mxu0 %v1307
        %1351 = vmatmul.mubr.bf16.gmra.mrb[0].mxu0 %v1037
        %v1352 = vpop.f32.mrb[0].mxu0
        %v1353 = vadd.f32 %v1094, %v1352
        %v1354 = vpop.f32.mrb[0].mxu0
        %v1355 = vadd.f32 %v1098, %v1354
        %v1356 = vpop.f32.mrb[0].mxu0
        %v1357 = vadd.f32 %v1094, %v1356
        %v1358 = vpop.f32.mrb[0].mxu0
        %v1359 = vadd.f32 %v1098, %v1358
        %1360 = vdwg.mxu0
        %1361 = vmatprep.subr.bf16.mxu0 0
        %1362 = vmatpush1.bf16.msra.mxu0 %v1233
        %1363 = vmatprep.subr.bf16.mxu0 0
        %1364 = vmatpush1.bf16.msra.mxu0 %v1236
        %1365 = vmatprep.subr.bf16.mxu0 0
        %1366 = vmatpush1.bf16.msra.mxu0 %v1239
        %1367 = vmatprep.subr.bf16.mxu0 0
        %1368 = vmatpush1.bf16.msra.mxu0 %v1242
        %1369 = vmatprep.subr.bf16.mxu0 0
        %1370 = vmatpush1.bf16.msra.mxu0 %v1245
        %1371 = vmatprep.subr.bf16.mxu0 0
        %1372 = vmatpush1.bf16.msra.mxu0 %v1248
        %1373 = vmatprep.subr.bf16.mxu0 0
        %1374 = vmatpush1.bf16.msra.mxu0 %v1251
        %1375 = vmatprep.subr.bf16.mxu0 0
        %1376 = vmatpush1.bf16.msra.mxu0 %v1254
        %1377 = vmatprep.subr.bf16.mxu0 0
        %1378 = vmatpush1.bf16.msra.mxu0 %v1257
        %1379 = vmatprep.subr.bf16.mxu0 0
        %1380 = vmatpush1.bf16.msra.mxu0 %v1260
        %1381 = vmatprep.subr.bf16.mxu0 0
        %1382 = vmatpush1.bf16.msra.mxu0 %v1263
        %1383 = vmatprep.subr.bf16.mxu0 0
        %1384 = vmatpush1.bf16.msra.mxu0 %v1266
        %1385 = vmatprep.subr.bf16.mxu0 0
        %1386 = vmatpush1.bf16.msra.mxu0 %v1316
        %1387 = vmatprep.subr.bf16.mxu0 0
        %1388 = vmatpush1.bf16.msra.mxu0 0
        %1389 = vmatprep.subr.bf16.mxu0 0
        %1390 = vmatpush1.bf16.msra.mxu0 0
        %1391 = vmatprep.subr.bf16.mxu0 0
        %1392 = vmatpush1.bf16.msra.mxu0 0
        %1393 = vmatprep.mubr.bf16.mxu0 %v1307
        %1394 = vmatmul.mubr.bf16.gmra.mrb[0].mxu0 %v1037
        %v1395 = vpop.f32.mrb[0].mxu0
        %v1396 = vadd.f32 %v1102, %v1395
        %v1397 = vpop.f32.mrb[0].mxu0
        %v1398 = vpop.f32.mrb[0].mxu0
        %v1399 = vadd.f32 %v1102, %v1398
        %v1400 = vpop.f32.mrb[0].mxu0
        %1401 = vdwg.mxu0
        %v1402 = vtanh.pop %v1353
        %v1403 = vtanh.pop %v1355
        %v1404 = vtanh.pop %v1396
        %v1405 = vtanh.pop %v1357
        %v1406 = vtanh.pop %v1359
        %v1407 = vtanh.pop %v1399
        %1408 = vst [vmem:[%s343] sm:$0xff] %v1402
        %1409 = vst [vmem:[%s343 + $0x8] sm:$0xff] %v1403
        %1410 = vst.msk [vmem:[%s343 + $0x10] sm:$0xff] %vm615, %v1404
        %1411 = vst [vmem:[%s343 + $0x18] sm:$0xff] %v1405
        %1412 = vst [vmem:[%s343 + $0x20] sm:$0xff] %v1406
        %1413 = vst.msk [vmem:[%s343 + $0x28] sm:$0xff] %vm615, %v1407
        %s1414 = sand.u32 %s225, 1
        %s1415 = scalar_lea.sflag [#allocation3], %s1414
        %s1416 = sand.u32 %s225, 1
        %s1417 = smul.addr %s1416, 48
        %s1418 = scalar_lea.vmem [#allocation2], %s1417
        // Predicated region
        $region57: #{_word_encoder_impl.1} parent=55 // pred_check
          %p1419 = pneg %p235
        $region58: #{_word_encoder_impl.1} parent=55 // pred_check_branch
          %1421 = sbr.rel (%p1419) target = $region60
        $region59: #{_word_encoder_impl.1} parent=55 // pred_region
          %s1422 = smul.u32 2, %s23
          %s1423 = ssub.s32 5, %s1422
          %p1424 = scmp.lt.s32.totalorder %s1423, 2
          %s1425 = scalar_select %p1424, %s1423, 2
          %s1426 = smul.u32 128, %s1425
          %s1427 = smul.u32 %s1426, 3
          %s1429 = ssub.s32 768, %s1427
          %1430 = vsyncadd %s1415, %s1429
          %p1431 = scmp.ne.s32.totalorder 0, %s1427
          %s1432 = smul.addr %s1422, 3
          %s1433 = smul.addr %s1432, 128
          %s1434 = scalar_lea.hbm %s9, %s1433
          %s1435 = smul.u32 24, %s1425
          %s1436 = sshll.u32 %s1418, 4
          %s1437 = int_to_ptr.vmem [resolvable:$true] %s1436
          %s1438 = sshll.u32 %s1435, 4
          %1442 = dma.vmem_to_hbm [thread:$0]  (%p1431), %s1437, %s1438, %s1434, %s1415, 384, 384, 24
        $region60: #{_word_encoder_impl.1} parent=55 // pred_fallthru
          _
      $region56: #{_word_encoder_impl.1} parent=5 // pred_fallthru
        _
      %p1443 = scmp.le.s32.totalorder 2, %s18
      // Predicated region
      $region61: #{_word_encoder_impl.1} parent=5 // pred_check
        %p1444 = pneg %p1443
      $region62: #{_word_encoder_impl.1} parent=5 // pred_check_branch
        %1446 = sbr.rel (%p1444) target = $region64
      $region63: #{_word_encoder_impl.1} parent=5 // pred_region
        %s1447 = ssub.s32 %s18, 2
        // Predicated region
        $region65: #{_word_encoder_impl.1} parent=63 // pred_check
          %p1448 = pneg %p241
        $region66: #{_word_encoder_impl.1} parent=63 // pred_check_branch
          %1450 = sbr.rel (%p1448) target = $region68
        $region67: #{_word_encoder_impl.1} parent=63 // pred_region
          %s1451 = sand.u32 %s226, 1
          %s1452 = scalar_lea.sflag [#allocation3], %s1451
          %s1453 = sand.u32 %s226, 1
          %s1454 = smul.addr %s1453, 48
          %s1455 = scalar_lea.vmem [#allocation2], %s1454
          %1456 = dma.done %s1452, 768
        $region68: #{_word_encoder_impl.1} parent=63 // pred_fallthru
          _
      $region64: #{_word_encoder_impl.1} parent=5 // pred_fallthru
        _
    $region6: #{_word_encoder_impl.1} parent=1 // loop_footer
      %s22 = sadd.s32 1, %s18
    $region7: #{_word_encoder_impl.1} parent=1 // loop_footer_branch
      %17 = sbr.rel target = $region3
    $region8: #{_word_encoder_impl.1} parent=1 // loop_exit
      _
    %1457 = vsyncpa [#allocation3], 1
    %s1458 = scalar_lea.sflag [#allocation3], 1
    %1459 = vsyncpa %s1458, 1

</llo_original>
